<compile_context>
chip_gen: v5e
topology: v5e:2x2
jax: 0.10.0
libtpu: 0.0.40
codegen_flags: <defaults>
</compile_context>

<pallas_src>
import math

import jax
import jax.numpy as jnp
from jax.experimental import pallas as pl
from jax.experimental.pallas import tpu as pltpu


_LANE = 128
_SUBLANE = 8
_LN10 = math.log(10.0)

# Dispatch heuristics / VMEM budgets ----------------------------------------
_JNP_FASTPATH_ELEMS = 4096            # below this: plain jnp, no kernel launch
_FULL_BLOCK_MAX_ELEMS = 128 * 1024    # <= 512 KiB f32: single full-array block
_FULLBLOCK_GROUP_BYTES = 4 * 1024 * 1024   # per fused full-block call
_TILE_VMEM_BUDGET = 12 * 1024 * 1024  # n_arrays x 4 buffers of tiles fit here
_MAX_TILE_C = 32768                   # 8 x 32768 f32 = 1 MiB per tile buffer
_MIN_TILE_C = 1024
_VMEM_LIMIT = 32 * 1024 * 1024        # <= v7x physical (64 MiB), > v5e default


def _round_up(x, m):
    return ((x + m - 1) // m) * m


def _cdiv(a, b):
    return -(-a // b)


def _hz_to_midi(hz):
    return 12.0 * (math.log2(hz) - math.log2(440.0)) + 69.0


# ---------------------------------------------------------------------------
# Elementwise scaling expressions (traced inside the kernel AND used for the
# plain-jnp fast path; constants are baked at trace time).
# ---------------------------------------------------------------------------
def _scale_expr(x, mode, low, high):
    if mode == "raw":
        return x
    if mode == "sigmoid":
        return x * (high - low) + low
    if mode == "freq_sigmoid":
        # util.unit_to_hz(x, low, high, clip=False):
        #   midi = x*(midi(high)-midi(low)) + midi(low); hz = 440*2**((midi-69)/12)
        # folded into a single affine + exp2: hz = exp2(x*a + b)
        m_lo = _hz_to_midi(low)
        m_hi = _hz_to_midi(high)
        a = (m_hi - m_lo) / 12.0
        b = (m_lo - 69.0) / 12.0 + math.log2(440.0)
        return jnp.exp2(x * a + b)
    if mode == "exp_sigmoid":
        # util.exp_scale(x, log(10), high, 1e-7+low) = high * x**log(10) + thr
        # TODO(synk): matches SCALE_FNS literally — assumes x already in [0,1]
        # (no extra sigmoid applied).
        threshold = 1e-7 + low
        return high * jnp.exp(_LN10 * jnp.log(x)) + threshold
    raise ValueError(f"unknown scale mode {mode!r}")


def _make_fused_kernel(specs):
    """One kernel body scaling all parameters; specs = [(mode, low, high), ...]."""
    n = len(specs)

    def kernel(*refs):
        in_refs, out_refs = refs[:n], refs[n:]
        for (mode, low, high), x_ref, o_ref in zip(specs, in_refs, out_refs):
            x = x_ref[...].astype(jnp.float32)       # compute in f32 (v5e-safe)
            o_ref[...] = _scale_expr(x, mode, low, high).astype(o_ref.dtype)

    return kernel


# ---------------------------------------------------------------------------
# Path A: mid-size arrays — one fused call, block == full array (no pad/slice)
# ---------------------------------------------------------------------------
def _scale_full_block(arrays, specs):
    arrays2d, orig_shapes = [], []
    for a in arrays:
        orig_shapes.append(a.shape)
        if a.ndim == 0:
            arrays2d.append(a.reshape(1, 1))
        elif a.ndim == 1:
            arrays2d.append(a.reshape(1, a.shape[0]))
        elif a.ndim == 2:
            arrays2d.append(a)
        else:
            arrays2d.append(a.reshape(-1, a.shape[-1]))

    zero_map = lambda i: (0, 0)
    in_specs = [pl.BlockSpec(a.shape, zero_map) for a in arrays2d]
    out_specs = tuple(pl.BlockSpec(a.shape, zero_map) for a in arrays2d)

    outs = pl.pallas_call(
        _make_fused_kernel(specs),
        out_shape=tuple(jax.ShapeDtypeStruct(a.shape, a.dtype) for a in arrays2d),
        grid=(1,),
        in_specs=in_specs,
        out_specs=out_specs,
        compiler_params=pltpu.CompilerParams(vmem_limit_bytes=_VMEM_LIMIT),
    )(*arrays2d)
    if not isinstance(outs, (tuple, list)):
        outs = (outs,)
    return [o.reshape(shp) for o, shp in zip(outs, orig_shapes)]


# ---------------------------------------------------------------------------
# Path B: large arrays — tiled lane-dense (8, cols) slabs, ~1 MiB tiles,
# even parallel grid, tail-only padding.  All arrays in a bucket share the
# same flat size & dtype so they share one fused call.
# ---------------------------------------------------------------------------
def _scale_tiled_bucket(arrays, specs):
    n = int(arrays[0].size)
    dtype = arrays[0].dtype
    itemsize = jnp.dtype(dtype).itemsize
    n_arr = len(arrays)

    # Derive tile width from VMEM budget: n_arr x (in+out) x double-buffer.
    budget_per_buf = _TILE_VMEM_BUDGET // max(1, n_arr * 4)
    tile_c_max = budget_per_buf // (_SUBLANE * itemsize)
    tile_c_max = max(_MIN_TILE_C, min(_MAX_TILE_C, (tile_c_max // _LANE) * _LANE))

    cols_needed = _cdiv(n, _SUBLANE)
    num_tiles = max(2, _cdiv(cols_needed, tile_c_max))
    if num_tiles % 2:                       # even grid -> both v7x TCs busy
        num_tiles += 1
    tile_c = _round_up(_cdiv(cols_needed, num_tiles), _LANE)
    cols = num_tiles * tile_c
    total = cols * _SUBLANE
    pad = total - n

    slabs = []
    for a in arrays:
        flat = a.reshape(-1)
        if pad:
            flat = jnp.pad(flat, (0, pad))   # tail-only; skipped when divisible
        slabs.append(flat.reshape(_SUBLANE, cols))

    block = pl.BlockSpec((_SUBLANE, tile_c), lambda i: (0, i))
    outs = pl.pallas_call(
        _make_fused_kernel(specs),
        out_shape=tuple(jax.ShapeDtypeStruct((_SUBLANE, cols), a.dtype) for a in arrays),
        grid=(num_tiles,),
        in_specs=[block] * n_arr,
        out_specs=tuple([block] * n_arr),
        compiler_params=pltpu.CompilerParams(
            dimension_semantics=("parallel",),
            vmem_limit_bytes=_VMEM_LIMIT,
        ),
    )(*slabs)
    if not isinstance(outs, (tuple, list)):
        outs = (outs,)

    results = []
    for o, a in zip(outs, arrays):
        flat = o.reshape(-1)
        if pad:
            flat = flat[:n]
        results.append(flat.reshape(a.shape))
    return results


# ---------------------------------------------------------------------------
# Dispatch: per-array fast path / full-block group / tiled buckets
# ---------------------------------------------------------------------------
def scale_params(arrays, specs):
    """Scale each array with its (mode, low, high) spec. Returns same order."""
    results = [None] * len(arrays)
    full_block_idx = []
    tiled_buckets = {}

    for i, (a, spec) in enumerate(zip(arrays, specs)):
        n = int(a.size)
        if n < _JNP_FASTPATH_ELEMS:
            # tiny control-rate tensors: launch overhead >> math; let XLA fuse.
            results[i] = _scale_expr(a.astype(jnp.float32), *spec).astype(a.dtype)
        elif n <= _FULL_BLOCK_MAX_ELEMS:
            full_block_idx.append(i)
        else:
            tiled_buckets.setdefault((n, jnp.dtype(a.dtype)), []).append(i)

    # Fused full-block calls, chunked so combined VMEM stays small.
    if full_block_idx:
        chunk, chunk_bytes = [], 0
        chunks = []
        for i in full_block_idx:
            b = int(arrays[i].size) * jnp.dtype(arrays[i].dtype).itemsize
            if chunk and chunk_bytes + b > _FULLBLOCK_GROUP_BYTES:
                chunks.append(chunk)
                chunk, chunk_bytes = [], 0
            chunk.append(i)
            chunk_bytes += b
        if chunk:
            chunks.append(chunk)
        for idxs in chunks:
            outs = _scale_full_block([arrays[i] for i in idxs],
                                     [specs[i] for i in idxs])
            for i, o in zip(idxs, outs):
                results[i] = o

    # One fused tiled call per (size, dtype) bucket — no max-size padding.
    for (_, _), idxs in tiled_buckets.items():
        outs = _scale_tiled_bucket([arrays[i] for i in idxs],
                                   [specs[i] for i in idxs])
        for i, o in zip(idxs, outs):
            results[i] = o

    return results


# ---------------------------------------------------------------------------
# Processor (JAX / Pallas port of the PyTorch module)
# ---------------------------------------------------------------------------
class Processor:
    def __init__(self, name):
        self.name = name
        self.param_desc = {}

    def process(self, scaled_params=(), **kwargs):
        out = dict(kwargs)
        keys, arrs, specs = [], [], []
        for k in kwargs:
            if k not in self.param_desc or k in scaled_params:
                continue
            desc = self.param_desc[k]
            if desc["type"] == "raw":
                continue  # identity — skip kernel launch / HBM copy entirely
            low, high = desc["range"]
            keys.append(k)
            arrs.append(kwargs[k])
            specs.append((desc["type"], float(low), float(high)))
        if keys:
            for k, v in zip(keys, scale_params(arrs, specs)):
                out[k] = v
        return self(**out)

    def __call__(self, **kwargs):
        return self.forward(**kwargs)

    def forward(self, **kwargs):
        # TODO(synk): base-class forward is abstract (raises NotImplementedError
        # in PyTorch); concrete synth processors must override it.
        raise NotImplementedError


class _DemoProcessor(Processor):
    """Minimal concrete subclass so process() can be exercised end-to-end:
    forward just returns the (already scaled) parameter dict."""

    def __init__(self):
        super().__init__("demo")
        self.param_desc = {
            # control-rate (tiny -> jnp fast path)
            "amp":   {"type": "exp_sigmoid",  "range": (0.0, 1.0)},
            "freq":  {"type": "freq_sigmoid", "range": (30.0, 8000.0)},
            "mod":   {"type": "sigmoid",      "range": (-1.0, 1.0)},
            "bias":  {"type": "raw",          "range": (0.0, 1.0)},
            # mid-size (full-block Pallas path)
            "env":   {"type": "sigmoid",      "range": (0.0, 2.0)},
            # audio-rate (tiled lane-dense Pallas path, fused bucket of 2)
            "wave":  {"type": "exp_sigmoid",  "range": (0.0, 1.0)},
            "noise": {"type": "freq_sigmoid", "range": (20.0, 16000.0)},
        }

    def forward(self, **kwargs):
        return kwargs


# ---------------------------------------------------------------------------
# Pure-JAX reference (literal translation of SCALE_FNS) for correctness check
# ---------------------------------------------------------------------------
def _ref_scale(x, mode, low, high):
    if mode == "raw":
        return x
    if mode == "sigmoid":
        return x * (high - low) + low
    if mode == "freq_sigmoid":
        m_lo = _hz_to_midi(low)
        m_hi = _hz_to_midi(high)
        midi = x * (m_hi - m_lo) + m_lo
        return 440.0 * (2.0 ** ((midi - 69.0) / 12.0))
    if mode == "exp_sigmoid":
        return high * jnp.power(x, _LN10) + (1e-7 + low)
    raise ValueError(mode)


if __name__ == "__main__":
    B, F = 2, 64          # control-rate frames
    ENV = 8000            # envelope frames (full-block path)
    AUDIO = 96000         # audio-rate samples (tiled path)

    key = jax.random.PRNGKey(0)
    keys = jax.random.split(key, 7)
    params = {
        "amp":   jax.random.uniform(keys[0], (B, F), jnp.float32),
        "freq":  jax.random.uniform(keys[1], (B, F), jnp.float32),
        "mod":   jax.random.uniform(keys[2], (B, F), jnp.float32),
        "bias":  jax.random.uniform(keys[3], (B, F), jnp.float32),
        "env":   jax.random.uniform(keys[4], (B, ENV), jnp.float32),
        "wave":  jax.random.uniform(keys[5], (B, AUDIO), jnp.float32),
        "noise": jax.random.uniform(keys[6], (B, AUDIO), jnp.float32),
    }

    proc = _DemoProcessor()
    out = proc.process(**params)
    out = jax.tree_util.tree_map(jax.block_until_ready, out)

    # correctness check vs. pure-JAX reference
    for k, v in out.items():
        desc = proc.param_desc[k]
        ref = _ref_scale(params[k], desc["type"], *map(float, desc["range"]))
        assert v.shape == params[k].shape, f"shape mismatch in {k}"
        assert v.dtype == params[k].dtype, f"dtype mismatch in {k}"
        assert jnp.allclose(v, ref, rtol=1e-4, atol=1e-4), f"mismatch in {k}"

    print("KERNEL_OK")
</pallas_src>

<mosaic_0001>
module attributes {stable_mosaic.version = 11 : i64} {
  func.func @kernel(%arg0: i32, %arg1: memref<2x8000xf32, #tpu.memory_space<vmem>>, %arg2: memref<2x8000xf32, #tpu.memory_space<vmem>>) attributes {dimension_semantics = [#tpu.dimension_semantics<arbitrary>], iteration_bounds = array<i64: 1>, scalar_prefetch = 0 : i64, scratch_operands = 0 : i64, tpu.core_type = #tpu.core_type<tc>, window_params = [{pipeline_mode = #tpu.pipeline_mode<synchronous>, transform_indices = @transform_0, window_bounds = array<i64: 2, 8000>}, {pipeline_mode = #tpu.pipeline_mode<synchronous>, transform_indices = @transform_1, window_bounds = array<i64: 2, 8000>}]} {
    %c0 = arith.constant 0 : index
    %c0_0 = arith.constant 0 : index
    %0 = vector.load %arg1[%c0, %c0_0] : memref<2x8000xf32, #tpu.memory_space<vmem>>, vector<2x8000xf32>
    %cst = arith.constant 2.000000e+00 : f32
    %1 = vector.broadcast %cst : f32 to vector<2x8000xf32>
    %2 = arith.mulf %0, %1 : vector<2x8000xf32>
    %cst_1 = arith.constant 0.000000e+00 : f32
    %3 = vector.broadcast %cst_1 : f32 to vector<2x8000xf32>
    %4 = arith.addf %2, %3 : vector<2x8000xf32>
    %c0_2 = arith.constant 0 : index
    %c0_3 = arith.constant 0 : index
    %5 = vector.load %arg2[%c0_2, %c0_3] : memref<2x8000xf32, #tpu.memory_space<vmem>>, vector<2x8000xf32>
    tpu.vector_store %arg2[%c0_2, %c0_3], %4 {strides = array<i32>} : memref<2x8000xf32, #tpu.memory_space<vmem>>, vector<2x8000xf32>,
    return
  }
  func.func @transform_0(%arg0: i32) -> (i32, i32) {
    %c0_i32 = arith.constant 0 : i32
    %c0_i32_0 = arith.constant 0 : i32
    %c0_i32_1 = arith.constant 0 : i32
    return %c0_i32, %c0_i32_0 : i32, i32
  }
  func.func @transform_1(%arg0: i32) -> (i32, i32) {
    %c0_i32 = arith.constant 0 : i32
    %c0_i32_0 = arith.constant 0 : i32
    %c0_i32_1 = arith.constant 0 : i32
    return %c0_i32, %c0_i32_0 : i32, i32
  }
}

</mosaic_0001>

<llo_original>
// kernel: tpu_custom_call.1
$region0: #{tpu_custom_call.1}
  #allocation0 [shape = 'u32[]', space=smem, size = 0x4, offset = 0x4, fixed_abs, tag = 'smem constant byte address 0x4 - core index']
  #allocation1 [shape = 'u32[72,128]{1,0:T(1,128)}', space=vmem, size = 0x9000, scoped, tag = 'internal scratch']
  %s0 = inlined_call_operand.hbm [shape: f32[2,8000], index: 0, kind: input, shape index: {}]
  %s1 = inlined_call_operand.hbm [shape: f32[2,8000], index: 1, kind: output, shape index: {}]
  %s2 = sld [smem:[#allocation0]]
  $region18: #{tpu_custom_call.1} parent=0
    _
  %s4 = ssub.s32 1, %s2
  %s5 = scalar_select 0, %s4, %s2
  $region1: #{tpu_custom_call.1} parent=0
    #allocation2 [shape = 'u8[64512]{0}', space=vmem, size = 0xfc00, scoped, tag = 'input window, operand 0, single buffered']
    #allocation3 [shape = 's32[1]{0}', space=sflag, size = 0x4, scoped, tag = 'scoped memory for tpu_custom_call.1']
    #allocation4 [shape = 's32[1]{0}', space=sflag, size = 0x4, scoped, tag = 'scoped memory for tpu_custom_call.1']
    #allocation5 [shape = 'u8[64512]{0}', space=vmem, size = 0xfc00, scoped, tag = 'output window, operand 0, single buffered']
    %6 = vsyncpa [#allocation3], 0
    %7 = vsyncpa [#allocation4], 0
    // Predicated region
    $region2: #{tpu_custom_call.1} parent=1 // pred_check
      _
    $region3: #{tpu_custom_call.1} parent=1 // pred_check_branch
      %9 = sbr.rel (0) target = $region5
    $region4: #{tpu_custom_call.1} parent=1 // pred_region
      %11 = vsyncadd [#allocation3], 0
      %s13 = sshll.u32 %s0, 4
      %s14 = int_to_ptr.hbm [resolvable:$true] %s13
      %s15 = sshll.u32 [#allocation2], 4
      %s16 = int_to_ptr.vmem [resolvable:$true] %s15
      %18 = dma.hbm_to_vmem [thread:$0]  %s14, 2016, %s16, [#allocation3]
    $region5: #{tpu_custom_call.1} parent=1 // pred_fallthru
      _
    // Predicated region
    $region6: #{tpu_custom_call.1} parent=1 // pred_check
      _
    $region7: #{tpu_custom_call.1} parent=1 // pred_check_branch
      %20 = sbr.rel (0) target = $region9
    $region8: #{tpu_custom_call.1} parent=1 // pred_region
      %22 = dma.done [#allocation3], 2016
    $region9: #{tpu_custom_call.1} parent=1 // pred_fallthru
      _
    %v23 = vld [vmem:[#allocation2] sm:$0xff]
    %v24 = vld [vmem:[#allocation2 + $0x8] sm:$0xff]
    %v25 = vld [vmem:[#allocation2 + $0x10] sm:$0xff]
    %v26 = vld [vmem:[#allocation2 + $0x18] sm:$0xff]
    %v27 = vld [vmem:[#allocation2 + $0x20] sm:$0xff]
    %v28 = vld [vmem:[#allocation2 + $0x28] sm:$0xff]
    %v29 = vld [vmem:[#allocation2 + $0x30] sm:$0xff]
    %v30 = vld [vmem:[#allocation2 + $0x38] sm:$0xff]
    %v31 = vld [vmem:[#allocation2 + $0x40] sm:$0xff]
    %v32 = vld [vmem:[#allocation2 + $0x48] sm:$0xff]
    %v33 = vld [vmem:[#allocation2 + $0x50] sm:$0xff]
    %v34 = vld [vmem:[#allocation2 + $0x58] sm:$0xff]
    %v35 = vld [vmem:[#allocation2 + $0x60] sm:$0xff]
    %v36 = vld [vmem:[#allocation2 + $0x68] sm:$0xff]
    %v37 = vld [vmem:[#allocation2 + $0x70] sm:$0xff]
    %v38 = vld [vmem:[#allocation2 + $0x78] sm:$0x3f]
    %v39 = vmul.f32 %v23, 2.0
    %v40 = vmul.f32 %v24, 2.0
    %v41 = vmul.f32 %v25, 2.0
    %v42 = vmul.f32 %v26, 2.0
    %v43 = vmul.f32 %v27, 2.0
    %v44 = vmul.f32 %v28, 2.0
    %v45 = vmul.f32 %v29, 2.0
    %v46 = vmul.f32 %v30, 2.0
    %v47 = vmul.f32 %v31, 2.0
    %v48 = vmul.f32 %v32, 2.0
    %v49 = vmul.f32 %v33, 2.0
    %v50 = vmul.f32 %v34, 2.0
    %v51 = vmul.f32 %v35, 2.0
    %v52 = vmul.f32 %v36, 2.0
    %v53 = vmul.f32 %v37, 2.0
    %v54 = vmul.f32 %v38, 2.0
    %v55 = vadd.f32 %v39, 0.0
    %v56 = vadd.f32 %v40, 0.0
    %v57 = vadd.f32 %v41, 0.0
    %v58 = vadd.f32 %v42, 0.0
    %v59 = vadd.f32 %v43, 0.0
    %v60 = vadd.f32 %v44, 0.0
    %v61 = vadd.f32 %v45, 0.0
    %v62 = vadd.f32 %v46, 0.0
    %v63 = vadd.f32 %v47, 0.0
    %v64 = vadd.f32 %v48, 0.0
    %v65 = vadd.f32 %v49, 0.0
    %v66 = vadd.f32 %v50, 0.0
    %v67 = vadd.f32 %v51, 0.0
    %v68 = vadd.f32 %v52, 0.0
    %v69 = vadd.f32 %v53, 0.0
    %v70 = vadd.f32 %v54, 0.0
    %71 = vst [vmem:[#allocation5] sm:$0xff] %v55
    %72 = vst [vmem:[#allocation5 + $0x8] sm:$0xff] %v56
    %73 = vst [vmem:[#allocation5 + $0x10] sm:$0xff] %v57
    %74 = vst [vmem:[#allocation5 + $0x18] sm:$0xff] %v58
    %75 = vst [vmem:[#allocation5 + $0x20] sm:$0xff] %v59
    %76 = vst [vmem:[#allocation5 + $0x28] sm:$0xff] %v60
    %77 = vst [vmem:[#allocation5 + $0x30] sm:$0xff] %v61
    %78 = vst [vmem:[#allocation5 + $0x38] sm:$0xff] %v62
    %79 = vst [vmem:[#allocation5 + $0x40] sm:$0xff] %v63
    %80 = vst [vmem:[#allocation5 + $0x48] sm:$0xff] %v64
    %81 = vst [vmem:[#allocation5 + $0x50] sm:$0xff] %v65
    %82 = vst [vmem:[#allocation5 + $0x58] sm:$0xff] %v66
    %83 = vst [vmem:[#allocation5 + $0x60] sm:$0xff] %v67
    %84 = vst [vmem:[#allocation5 + $0x68] sm:$0xff] %v68
    %85 = vst [vmem:[#allocation5 + $0x70] sm:$0xff] %v69
    %vm86 = vcmask 1041408
    %vm87 = vcmask 1043458
    %vm88 = vmor %vm87, %vm86
    %vm89 = vcmask 521220
    %vm90 = vmor %vm89, %vm88
    %91 = vst.msk [vmem:[#allocation5 + $0x78] sm:$0x3f] %vm90, %v70
    // Predicated region
    $region10: #{tpu_custom_call.1} parent=1 // pred_check
      _
    $region11: #{tpu_custom_call.1} parent=1 // pred_check_branch
      %93 = sbr.rel (0) target = $region13
    $region12: #{tpu_custom_call.1} parent=1 // pred_region
      %95 = vsyncadd [#allocation4], 0
      %s97 = sshll.u32 [#allocation5], 4
      %s98 = int_to_ptr.vmem [resolvable:$true] %s97
      %s99 = sshll.u32 %s1, 4
      %s100 = int_to_ptr.hbm [resolvable:$true] %s99
      %102 = dma.vmem_to_hbm [thread:$0]  %s98, 2016, %s100, [#allocation4]
    $region13: #{tpu_custom_call.1} parent=1 // pred_fallthru
      _
    // Predicated region
    $region14: #{tpu_custom_call.1} parent=1 // pred_check
      _
    $region15: #{tpu_custom_call.1} parent=1 // pred_check_branch
      %104 = sbr.rel (0) target = $region17
    $region16: #{tpu_custom_call.1} parent=1 // pred_region
      %106 = dma.done [#allocation4], 2016
    $region17: #{tpu_custom_call.1} parent=1 // pred_fallthru
      _
    %107 = vsyncpa [#allocation3], 1
    %108 = vsyncpa [#allocation4], 1

</llo_original>
